<compile_context>
chip_gen: v6e
topology: v6e:2x2x1
jax: 0.10.0
libtpu: 0.0.40
codegen_flags: <defaults>
</compile_context>

<pallas_src>
from functools import lru_cache, partial

import numpy as np
import jax
import jax.numpy as jnp
from jax.experimental import pallas as pl
from jax.experimental.pallas import tpu as pltpu

LANES = 128          # tasks packed along the lane axis, padded to one vreg width
META_ROWS = 3        # log_var / count / scalar rows
_MAX_BLOCK_ROWS = 512  # 256 KiB f32 per grid step at 128 lanes


def _round_up(x: int, m: int) -> int:
    return -(-x // m) * m


def _choose_block_rows(s_max: int) -> int:
    if s_max <= _MAX_BLOCK_ROWS:
        return max(8, _round_up(s_max, 8))   # single-step grid for small losses
    return _MAX_BLOCK_ROWS


def _uncertainty_fused_kernel(loss_ref, meta_ref, out_ref):
    """Fused per-task reduction + uncertainty-weighting epilogue.

    loss_ref : (block_rows, 128) block of the packed loss matrix
               (tasks -> lanes, loss elements -> rows, zero padded).
    meta_ref : (3, 128)  row0 = log_var, row1 = element count, row2 = scalar.
    out_ref  : (1, 128)  resident accumulator / final result per task lane.
    """
    k = pl.program_id(0)

    @pl.when(k == 0)
    def _init():
        out_ref[...] = jnp.zeros_like(out_ref)

    # Partial per-lane (per-task) sum of this row block (XLU cross-sublane reduce).
    out_ref[...] += jnp.sum(loss_ref[...], axis=0, keepdims=True)

    @pl.when(k == pl.num_programs(0) - 1)
    def _finalize():
        log_var = meta_ref[0:1, :]
        count = meta_ref[1:2, :]
        scalar = meta_ref[2:3, :]
        precision = jnp.exp(-log_var)                       # EUP transcendental
        # scalar * (precision * sum(loss) + N * log_var)  -- a few VPU ops.
        out_ref[...] = scalar * (precision * out_ref[...] + count * log_var)


@lru_cache(maxsize=None)
def _get_uncertainty_call(s_pad: int, block_rows: int):
    grid = (s_pad // block_rows,)
    return pl.pallas_call(
        _uncertainty_fused_kernel,
        out_shape=jax.ShapeDtypeStruct((1, LANES), jnp.float32),
        grid_spec=pltpu.PrefetchScalarGridSpec(
            num_scalar_prefetch=0,
            grid=grid,
            in_specs=[
                pl.BlockSpec((block_rows, LANES), lambda k: (k, 0)),
                pl.BlockSpec((META_ROWS, LANES), lambda k: (0, 0)),  # resident
            ],
            out_specs=pl.BlockSpec((1, LANES), lambda k: (0, 0)),    # resident acc
        ),
        compiler_params=pltpu.CompilerParams(
            dimension_semantics=("arbitrary",)),   # reduction axis
    )


@partial(jax.jit, static_argnums=(0, 1))
def _forward_impl(idx, scalars, log_vars, *loss_values):
    """idx / scalars are static tuples (gather indices, 2.0/1.0 per task);
    loss_values are the per-task loss tensors in packed (categorical-first)
    order.  Returns the packed (n,) result (device array)."""
    n = len(loss_values)

    # Single cast location; flatten each per-task loss to 1-D.
    flat = [jnp.asarray(v, jnp.float32).reshape(-1) for v in loss_values]
    counts = [f.shape[0] for f in flat]                     # static at trace time
    s_max = max(counts)
    block_rows = _choose_block_rows(s_max)
    s_pad = _round_up(s_max, block_rows)

    # Pack losses: tasks -> lanes, elements -> rows (zero padded rows/lanes).
    cols = [jnp.pad(f, (0, s_pad - f.shape[0])) for f in flat]
    loss_mat = jnp.stack(cols, axis=1)                      # (s_pad, n)
    loss_mat = jnp.pad(loss_mat, ((0, 0), (0, LANES - n)))  # (s_pad, 128)

    # Metadata: log_var / raw count / scalar per lane (counts & scalars are
    # trace-time numpy constants, NOT kernel statics).
    idx_arr = np.asarray(idx, dtype=np.int32)
    if n == log_vars.shape[0] and np.array_equal(idx_arr, np.arange(n)):
        lv = log_vars                                       # skip the gather
    else:
        lv = log_vars[idx_arr]                              # one small gather
    cnt_row = np.zeros((LANES,), np.float32)
    cnt_row[:n] = np.asarray(counts, np.float32)
    sc_row = np.zeros((LANES,), np.float32)
    sc_row[:n] = np.asarray(scalars, np.float32)
    meta = jnp.stack([jnp.pad(lv, (0, LANES - n)),
                      jnp.asarray(cnt_row),
                      jnp.asarray(sc_row)])                 # (3, 128)

    out = _get_uncertainty_call(s_pad, block_rows)(loss_mat, meta)  # (1, 128)
    return out[0, :n]


class UncertaintyMultiTaskLossPallas:
    """JAX/Pallas re-implementation of eir's UncertaintyMultiTaskLoss forward."""

    # TODO(synk): log_vars are trainable nn.Parameters in the original; only the
    # forward pass is implemented here (no autograd parameter registration).

    def __init__(self, target_cat_columns, target_con_columns):
        self.target_cat_columns = list(target_cat_columns)
        self.target_con_columns = list(target_con_columns)
        self.columns = self.target_cat_columns + self.target_con_columns
        assert 0 < len(self.columns) <= LANES
        self._cat_set = set(self.target_cat_columns)
        self._col_index = {c: i for i, c in enumerate(self.columns)}
        # nn.Parameter(torch.zeros(1)) per column -> one packed zeros vector.
        self.log_vars = jnp.zeros((len(self.columns),), dtype=jnp.float32)

    def forward_packed(self, losses_dict):
        """Fast path: returns (ordered_names, packed (n,) device result)."""
        names = list(losses_dict.keys())
        cat_names = [nm for nm in names if nm in self._cat_set]
        con_names = [nm for nm in names if nm not in self._cat_set]
        ordered = cat_names + con_names                     # categorical lanes first
        n = len(ordered)
        assert 0 < n <= LANES

        idx = tuple(self._col_index[nm] for nm in ordered)
        scalars = tuple(2.0 if nm in self._cat_set else 1.0 for nm in ordered)
        loss_values = tuple(losses_dict[nm] for nm in ordered)

        res = _forward_impl(idx, scalars, self.log_vars, *loss_values)
        return ordered, res

    def forward(self, losses_dict):
        ordered, res = self.forward_packed(losses_dict)
        host = np.asarray(jax.device_get(res))              # ONE tiny D2H transfer
        pos = {nm: i for i, nm in enumerate(ordered)}
        # Dict API of the original module (keys in the caller's order).
        return {nm: host[pos[nm]] for nm in losses_dict}

    __call__ = forward


def _reference_forward(module, losses_dict):
    """Pure-JAX reference mirroring the PyTorch code exactly."""
    out = {}
    for name, loss_value in losses_dict.items():
        log_var = module.log_vars[module._col_index[name]]
        scalar = 2.0 if name in module.target_cat_columns else 1.0
        precision = jnp.exp(-log_var)
        out[name] = scalar * jnp.sum(
            precision * jnp.asarray(loss_value, jnp.float32) + log_var)
    return out


if __name__ == "__main__":
    target_cat_columns = ["disease_status", "ancestry"]
    target_con_columns = ["height", "bmi", "age"]

    module = UncertaintyMultiTaskLossPallas(target_cat_columns, target_con_columns)

    # Deterministic example per-task losses: scalar losses, one per-sample
    # (batch=8) loss, and one per-token (4, 150) loss — the last one exceeds
    # one 512-row block so the multi-step reduction grid is exercised.
    key = jax.random.PRNGKey(0)
    keys = jax.random.split(key, len(module.columns))
    shapes = {
        "disease_status": (),
        "ancestry": (),
        "height": (),
        "bmi": (4, 150),
        "age": (8,),
    }
    losses_dict = {
        name: jnp.abs(jax.random.normal(k, shapes[name])).astype(jnp.float32)
        for name, k in zip(module.columns, keys)
    }

    # Fast packed path: one fused pallas_call, result stays on device.
    ordered, packed = module.forward_packed(losses_dict)
    packed = jax.block_until_ready(packed)
    packed_np = np.asarray(packed)

    ref = _reference_forward(losses_dict=losses_dict, module=module)
    for i, name in enumerate(ordered):
        assert np.allclose(packed_np[i], np.asarray(ref[name]),
                           rtol=1e-5, atol=1e-6), (name, packed_np[i], ref[name])

    # Dict API path (single host fetch, original-module interface).
    out_dict = module(losses_dict)
    for name in module.columns:
        assert np.allclose(np.asarray(out_dict[name]), np.asarray(ref[name]),
                           rtol=1e-5, atol=1e-6), (name, out_dict[name], ref[name])

    print("KERNEL_OK")
</pallas_src>

<mosaic_0001>
module attributes {stable_mosaic.version = 11 : i64} {
  func.func @_uncertainty_fused_kernel(%arg0: i32, %arg1: memref<512x128xf32, #tpu.memory_space<vmem>>, %arg2: memref<3x128xf32, #tpu.memory_space<vmem>>, %arg3: memref<1x128xf32, #tpu.memory_space<vmem>>) attributes {dimension_semantics = [#tpu.dimension_semantics<arbitrary>], iteration_bounds = array<i64: 2>, scalar_prefetch = 0 : i64, scratch_operands = 0 : i64, tpu.core_type = #tpu.core_type<tc>, window_params = [{transform_indices = @transform_0, window_bounds = array<i64: 512, 128>}, {pipeline_mode = #tpu.pipeline_mode<synchronous>, transform_indices = @transform_1, window_bounds = array<i64: 3, 128>}, {pipeline_mode = #tpu.pipeline_mode<synchronous>, transform_indices = @transform_2, window_bounds = array<i64: 1, 128>}]} {
    %c0_i32 = arith.constant 0 : i32
    %0 = arith.cmpi eq, %arg0, %c0_i32 : i32
    %1 = arith.extui %0 : i1 to i32
    %c0_i32_0 = arith.constant 0 : i32
    %2 = arith.cmpi ne, %1, %c0_i32_0 : i32
    scf.if %2 {
      %cst_7 = arith.constant 0.000000e+00 : f32
      %12 = vector.broadcast %cst_7 : f32 to vector<1x128xf32>
      %c0_8 = arith.constant 0 : index
      %c0_9 = arith.constant 0 : index
      %13 = vector.load %arg3[%c0_8, %c0_9] : memref<1x128xf32, #tpu.memory_space<vmem>>, vector<1x128xf32>
      tpu.vector_store %arg3[%c0_8, %c0_9], %12 {strides = array<i32>} : memref<1x128xf32, #tpu.memory_space<vmem>>, vector<1x128xf32>,
    } else {
    }
    %c0 = arith.constant 0 : index
    %c0_1 = arith.constant 0 : index
    %3 = vector.load %arg3[%c0, %c0_1] : memref<1x128xf32, #tpu.memory_space<vmem>>, vector<1x128xf32>
    %c0_2 = arith.constant 0 : index
    %c0_3 = arith.constant 0 : index
    %4 = vector.load %arg1[%c0_2, %c0_3] : memref<512x128xf32, #tpu.memory_space<vmem>>, vector<512x128xf32>
    %cst = arith.constant dense<0.000000e+00> : vector<128xf32>
    %5 = vector.multi_reduction <add>, %4, %cst [0] : vector<512x128xf32> to vector<128xf32>
    %6 = vector.shape_cast %5 : vector<128xf32> to vector<1x128xf32>
    %7 = arith.addf %3, %6 : vector<1x128xf32>
    %c0_4 = arith.constant 0 : index
    %c0_5 = arith.constant 0 : index
    %8 = vector.load %arg3[%c0_4, %c0_5] : memref<1x128xf32, #tpu.memory_space<vmem>>, vector<1x128xf32>
    tpu.vector_store %arg3[%c0_4, %c0_5], %7 {strides = array<i32>} : memref<1x128xf32, #tpu.memory_space<vmem>>, vector<1x128xf32>,
    %c1_i32 = arith.constant 1 : i32
    %9 = arith.cmpi eq, %arg0, %c1_i32 : i32
    %10 = arith.extui %9 : i1 to i32
    %c0_i32_6 = arith.constant 0 : i32
    %11 = arith.cmpi ne, %10, %c0_i32_6 : i32
    scf.if %11 {
      %c0_7 = arith.constant 0 : index
      %c0_8 = arith.constant 0 : index
      %12 = vector.load %arg2[%c0_7, %c0_8] : memref<3x128xf32, #tpu.memory_space<vmem>>, vector<1x128xf32>
      %c1 = arith.constant 1 : index
      %c0_9 = arith.constant 0 : index
      %13 = vector.load %arg2[%c1, %c0_9] : memref<3x128xf32, #tpu.memory_space<vmem>>, vector<1x128xf32>
      %c2 = arith.constant 2 : index
      %c0_10 = arith.constant 0 : index
      %14 = vector.load %arg2[%c2, %c0_10] : memref<3x128xf32, #tpu.memory_space<vmem>>, vector<1x128xf32>
      %cst_11 = arith.constant 0.000000e+00 : f32
      %15 = vector.broadcast %cst_11 : f32 to vector<1x128xf32>
      %16 = arith.subf %15, %12 : vector<1x128xf32>
      %17 = math.exp %16 : vector<1x128xf32>
      %c0_12 = arith.constant 0 : index
      %c0_13 = arith.constant 0 : index
      %18 = vector.load %arg3[%c0_12, %c0_13] : memref<1x128xf32, #tpu.memory_space<vmem>>, vector<1x128xf32>
      %19 = arith.mulf %17, %18 : vector<1x128xf32>
      %20 = arith.mulf %13, %12 : vector<1x128xf32>
      %21 = arith.addf %19, %20 : vector<1x128xf32>
      %22 = arith.mulf %14, %21 : vector<1x128xf32>
      %c0_14 = arith.constant 0 : index
      %c0_15 = arith.constant 0 : index
      %23 = vector.load %arg3[%c0_14, %c0_15] : memref<1x128xf32, #tpu.memory_space<vmem>>, vector<1x128xf32>
      tpu.vector_store %arg3[%c0_14, %c0_15], %22 {strides = array<i32>} : memref<1x128xf32, #tpu.memory_space<vmem>>, vector<1x128xf32>,
    } else {
    }
    return
  }
  func.func @transform_0(%arg0: i32) -> (i32, i32) {
    %c0_i32 = arith.constant 0 : i32
    %c0_i32_0 = arith.constant 0 : i32
    return %arg0, %c0_i32 : i32, i32
  }
  func.func @transform_1(%arg0: i32) -> (i32, i32) {
    %c0_i32 = arith.constant 0 : i32
    %c0_i32_0 = arith.constant 0 : i32
    %c0_i32_1 = arith.constant 0 : i32
    return %c0_i32, %c0_i32_0 : i32, i32
  }
  func.func @transform_2(%arg0: i32) -> (i32, i32) {
    %c0_i32 = arith.constant 0 : i32
    %c0_i32_0 = arith.constant 0 : i32
    %c0_i32_1 = arith.constant 0 : i32
    return %c0_i32, %c0_i32_0 : i32, i32
  }
}

</mosaic_0001>

<llo_original>
// kernel: _forward_impl.1
$region0: #{_forward_impl.1}
  #allocation0 [shape = 'u32[]', space=smem, size = 0x4, offset = 0x4, fixed_abs, tag = 'smem constant byte address 0x4 - core index']
  #allocation1 [shape = 'u32[144,128]{1,0:T(1,128)}', space=vmem, size = 0x12000, scoped, tag = 'internal scratch']
  %s0 = inlined_call_operand.vmem [shape: f32[1024,128], index: 0, kind: input, shape index: {}]
  %s1 = inlined_call_operand.vmem [shape: f32[3,128], index: 1, kind: input, shape index: {}]
  %s2 = inlined_call_operand.vmem [shape: f32[1,128], index: 2, kind: output, shape index: {}]
  %s3 = sld [smem:[#allocation0]]
  $region49: #{_forward_impl.1} parent=0
    _
  %s5 = ssub.s32 1, %s3
  %s6 = scalar_select 0, %s5, %s3
  loop: start=0, step=1, limit=4
  $region2: #{_forward_impl.1} parent=0 // loop_pre_header
    _
  $region3: #{_forward_impl.1} parent=0 // loop_header
    %s8 = sphi 0, %s12
    %p9 = scmp.ge.s32.totalorder %s8, 4
    %s18 = sphi 0, %s20
    %s21 = sphi 0, %s18
    %s22 = sphi 0, %s21
    %s38 = sphi 0, %s22
    %s42 = sphi 0, %s42
    %s44 = sphi 0, %s42
    %s45 = sphi 0, %s44
    %s59 = sphi 0, %s45
    %s63 = sphi 0, %s63
    %s65 = sphi 0, %s63
    %s66 = sphi 0, %s65
    %s80 = sphi 0, %s66
  $region4: #{_forward_impl.1} parent=0 // loop_header_branch
    %11 = sbr.rel (%p9) target = $region8
  $region5: #{_forward_impl.1} parent=0 // loop_body
    %s13 = ssub.s32 %s8, 1
    %s14 = ssub.s32 %s8, 2
    %s15 = sadd.s32 %s8, 1
    %s16 = ssub.s32 %s8, %s15
    %p17 = scmp.eq.s32.totalorder %s16, 0
    %s19 = sadd.s32 %s18, 1
    %s20 = scalar_select %p17, %s18, %s19
    %p23 = pneg %p17
    %p24 = scmp.eq.s32.totalorder %s8, 1
    %p25 = por %p23, %p24
    %p26 = scmp.ne.s32.totalorder %s18, %s21
    %p27 = scmp.eq.s32.totalorder %s8, 0
    %p28 = por %p26, %p27
    %p29 = scmp.ne.s32.totalorder %s18, %s21
    %p30 = scmp.eq.s32.totalorder %s13, 1
    %p31 = por %p29, %p30
    %p32 = scmp.ne.s32.totalorder %s21, %s22
    %p33 = scmp.eq.s32.totalorder %s13, 0
    %p34 = por %p32, %p33
    %p35 = scmp.ne.s32.totalorder %s21, %s22
    %p36 = scmp.eq.s32.totalorder %s14, 1
    %p37 = por %p35, %p36
    %p39 = scmp.ne.s32.totalorder %s22, %s38
    %p40 = scmp.eq.s32.totalorder %s14, 0
    %p41 = por %p39, %p40
    %s43 = sadd.s32 %s42, 1
    %p46 = scmp.eq.s32.totalorder %s8, 1
    %p47 = scmp.ne.s32.totalorder %s42, %s44
    %p48 = scmp.eq.s32.totalorder %s8, 0
    %p49 = por %p47, %p48
    %p50 = scmp.ne.s32.totalorder %s42, %s44
    %p51 = scmp.eq.s32.totalorder %s13, 1
    %p52 = por %p50, %p51
    %p53 = scmp.ne.s32.totalorder %s44, %s45
    %p54 = scmp.eq.s32.totalorder %s13, 0
    %p55 = por %p53, %p54
    %p56 = scmp.ne.s32.totalorder %s44, %s45
    %p57 = scmp.eq.s32.totalorder %s14, 1
    %p58 = por %p56, %p57
    %p60 = scmp.ne.s32.totalorder %s45, %s59
    %p61 = scmp.eq.s32.totalorder %s14, 0
    %p62 = por %p60, %p61
    %s64 = sadd.s32 %s63, 1
    %p67 = scmp.eq.s32.totalorder %s8, 1
    %p68 = scmp.ne.s32.totalorder %s63, %s65
    %p69 = scmp.eq.s32.totalorder %s8, 0
    %p70 = por %p68, %p69
    %p71 = scmp.ne.s32.totalorder %s63, %s65
    %p72 = scmp.eq.s32.totalorder %s13, 1
    %p73 = por %p71, %p72
    %p74 = scmp.ne.s32.totalorder %s65, %s66
    %p75 = scmp.eq.s32.totalorder %s13, 0
    %p76 = por %p74, %p75
    %p77 = scmp.ne.s32.totalorder %s65, %s66
    %p78 = scmp.eq.s32.totalorder %s14, 1
    %p79 = por %p77, %p78
    %p81 = scmp.ne.s32.totalorder %s66, %s80
    %p82 = scmp.eq.s32.totalorder %s14, 0
    %p83 = por %p81, %p82
    %p84 = scmp.le.s32.totalorder 1, %s8
    %p85 = scmp.lt.s32.totalorder %s8, 3
    %p86 = pnand %p84, %p85
    %p87 = pneg %p86
    // Predicated region
    $region9: #{_forward_impl.1} parent=5 // pred_check
      _
    $region10: #{_forward_impl.1} parent=5 // pred_check_branch
      %89 = sbr.rel (%p86) target = $region12
    $region11: #{_forward_impl.1} parent=5 // pred_region
      %s90 = ssub.s32 %s8, 1
      // Predicated region
      $region13: #{_forward_impl.1} parent=11 // pred_check
        %p91 = pneg %p55
      $region14: #{_forward_impl.1} parent=11 // pred_check_branch
        %93 = sbr.rel (%p91) target = $region16
      $region15: #{_forward_impl.1} parent=11 // pred_region
        _
      $region16: #{_forward_impl.1} parent=11 // pred_fallthru
        _
    $region12: #{_forward_impl.1} parent=5 // pred_fallthru
      _
    %p94 = scmp.lt.s32.totalorder %s8, 2
    // Predicated region
    $region17: #{_forward_impl.1} parent=5 // pred_check
      %p95 = pneg %p94
    $region18: #{_forward_impl.1} parent=5 // pred_check_branch
      %97 = sbr.rel (%p95) target = $region20
    $region19: #{_forward_impl.1} parent=5 // pred_region
      // Predicated region
      $region21: #{_forward_impl.1} parent=19 // pred_check
        %p98 = pneg %p28
      $region22: #{_forward_impl.1} parent=19 // pred_check_branch
        %100 = sbr.rel (%p98) target = $region24
      $region23: #{_forward_impl.1} parent=19 // pred_region
        %s101 = smul.u32 64, %s8
        %p102 = scmp.lt.s32.totalorder %s101, 127
        %s103 = scalar_select %p102, %s101, 127
        %s104 = smul.addr %s103, 8
        %s105 = scalar_lea.vmem %s0, %s104
        %s106 = smul.u32 64, %s8
      $region24: #{_forward_impl.1} parent=19 // pred_fallthru
        _
    $region20: #{_forward_impl.1} parent=5 // pred_fallthru
      _
    %p107 = scmp.le.s32.totalorder 1, %s8
    %p108 = scmp.lt.s32.totalorder %s8, 3
    %p109 = pnand %p107, %p108
    %p110 = pneg %p109
    // Predicated region
    $region25: #{_forward_impl.1} parent=5 // pred_check
      _
    $region26: #{_forward_impl.1} parent=5 // pred_check_branch
      %112 = sbr.rel (%p109) target = $region28
    $region27: #{_forward_impl.1} parent=5 // pred_region
      %s113 = ssub.s32 %s8, 1
      %s114 = smul.u32 64, %s13
      %p115 = scmp.lt.s32.totalorder %s114, 127
      %s116 = scalar_select %p115, %s114, 127
      %s117 = smul.addr %s116, 8
      %s118 = scalar_lea.vmem %s0, %s117
      %p119 = pneg %p34
      %p120 = pneg %p31
      %p121 = pneg %p55
      %p122 = pneg %p52
      %p123 = pneg %p76
      %p124 = pneg %p73
      %s125 = smul.u32 64, %s13
      %p126 = scmp.lt.s32.totalorder %s125, 127
      %s127 = scalar_select %p126, %s125, 127
      %s128 = smul.addr %s127, 8
      %s129 = scalar_lea.vmem %s0, %s128
      %s130 = smul.u32 64, %s13
      %p131 = scmp.eq.s32.totalorder %s13, 0
      // Predicated region
      $region29: #{_forward_impl.1} parent=27 // pred_check
        %p132 = pneg %p131
      $region30: #{_forward_impl.1} parent=27 // pred_check_branch
        %134 = sbr.rel (%p132) target = $region32
      $region31: #{_forward_impl.1} parent=27 // pred_region
        %135 = vst [vmem:[%s2] sm:$0x1] 0.0
      $region32: #{_forward_impl.1} parent=27 // pred_fallthru
        _
      %v136 = vld [vmem:[%s2] sm:$0x1]
      %v137 = vld [vmem:[%s129] sm:$0xff]
      %v138 = vld [vmem:[%s129 + $0x8] sm:$0xff]
      %v139 = vld [vmem:[%s129 + $0x10] sm:$0xff]
      %v140 = vld [vmem:[%s129 + $0x18] sm:$0xff]
      %v141 = vld [vmem:[%s129 + $0x20] sm:$0xff]
      %v142 = vld [vmem:[%s129 + $0x28] sm:$0xff]
      %v143 = vld [vmem:[%s129 + $0x30] sm:$0xff]
      %v144 = vld [vmem:[%s129 + $0x38] sm:$0xff]
      %v145 = vld [vmem:[%s129 + $0x40] sm:$0xff]
      %v146 = vld [vmem:[%s129 + $0x48] sm:$0xff]
      %v147 = vld [vmem:[%s129 + $0x50] sm:$0xff]
      %v148 = vld [vmem:[%s129 + $0x58] sm:$0xff]
      %v149 = vld [vmem:[%s129 + $0x60] sm:$0xff]
      %v150 = vld [vmem:[%s129 + $0x68] sm:$0xff]
      %v151 = vld [vmem:[%s129 + $0x70] sm:$0xff]
      %v152 = vld [vmem:[%s129 + $0x78] sm:$0xff]
      %v153 = vld [vmem:[%s129 + $0x80] sm:$0xff]
      %v154 = vld [vmem:[%s129 + $0x88] sm:$0xff]
      %v155 = vld [vmem:[%s129 + $0x90] sm:$0xff]
      %v156 = vld [vmem:[%s129 + $0x98] sm:$0xff]
      %v157 = vld [vmem:[%s129 + $0xa0] sm:$0xff]
      %v158 = vld [vmem:[%s129 + $0xa8] sm:$0xff]
      %v159 = vld [vmem:[%s129 + $0xb0] sm:$0xff]
      %v160 = vld [vmem:[%s129 + $0xb8] sm:$0xff]
      %v161 = vld [vmem:[%s129 + $0xc0] sm:$0xff]
      %v162 = vld [vmem:[%s129 + $0xc8] sm:$0xff]
      %v163 = vld [vmem:[%s129 + $0xd0] sm:$0xff]
      %v164 = vld [vmem:[%s129 + $0xd8] sm:$0xff]
      %v165 = vld [vmem:[%s129 + $0xe0] sm:$0xff]
      %v166 = vld [vmem:[%s129 + $0xe8] sm:$0xff]
      %v167 = vld [vmem:[%s129 + $0xf0] sm:$0xff]
      %v168 = vld [vmem:[%s129 + $0xf8] sm:$0xff]
      %v169 = vld [vmem:[%s129 + $0x100] sm:$0xff]
      %v170 = vld [vmem:[%s129 + $0x108] sm:$0xff]
      %v171 = vld [vmem:[%s129 + $0x110] sm:$0xff]
      %v172 = vld [vmem:[%s129 + $0x118] sm:$0xff]
      %v173 = vld [vmem:[%s129 + $0x120] sm:$0xff]
      %v174 = vld [vmem:[%s129 + $0x128] sm:$0xff]
      %v175 = vld [vmem:[%s129 + $0x130] sm:$0xff]
      %v176 = vld [vmem:[%s129 + $0x138] sm:$0xff]
      %v177 = vld [vmem:[%s129 + $0x140] sm:$0xff]
      %v178 = vld [vmem:[%s129 + $0x148] sm:$0xff]
      %v179 = vld [vmem:[%s129 + $0x150] sm:$0xff]
      %v180 = vld [vmem:[%s129 + $0x158] sm:$0xff]
      %v181 = vld [vmem:[%s129 + $0x160] sm:$0xff]
      %v182 = vld [vmem:[%s129 + $0x168] sm:$0xff]
      %v183 = vld [vmem:[%s129 + $0x170] sm:$0xff]
      %v184 = vld [vmem:[%s129 + $0x178] sm:$0xff]
      %v185 = vld [vmem:[%s129 + $0x180] sm:$0xff]
      %v186 = vld [vmem:[%s129 + $0x188] sm:$0xff]
      %v187 = vld [vmem:[%s129 + $0x190] sm:$0xff]
      %v188 = vld [vmem:[%s129 + $0x198] sm:$0xff]
      %v189 = vld [vmem:[%s129 + $0x1a0] sm:$0xff]
      %v190 = vld [vmem:[%s129 + $0x1a8] sm:$0xff]
      %v191 = vld [vmem:[%s129 + $0x1b0] sm:$0xff]
      %v192 = vld [vmem:[%s129 + $0x1b8] sm:$0xff]
      %v193 = vld [vmem:[%s129 + $0x1c0] sm:$0xff]
      %v194 = vld [vmem:[%s129 + $0x1c8] sm:$0xff]
      %v195 = vld [vmem:[%s129 + $0x1d0] sm:$0xff]
      %v196 = vld [vmem:[%s129 + $0x1d8] sm:$0xff]
      %v197 = vld [vmem:[%s129 + $0x1e0] sm:$0xff]
      %v198 = vld [vmem:[%s129 + $0x1e8] sm:$0xff]
      %v199 = vld [vmem:[%s129 + $0x1f0] sm:$0xff]
      %v200 = vld [vmem:[%s129 + $0x1f8] sm:$0xff]
      %v201 = vadd.f32 %v137, %v138
      %v202 = vadd.f32 %v201, %v139
      %v203 = vadd.f32 %v202, %v140
      %v204 = vadd.f32 %v203, %v141
      %v205 = vadd.f32 %v204, %v142
      %v206 = vadd.f32 %v205, %v143
      %v207 = vadd.f32 %v206, %v144
      %v208 = vadd.f32 %v207, %v145
      %v209 = vadd.f32 %v208, %v146
      %v210 = vadd.f32 %v209, %v147
      %v211 = vadd.f32 %v210, %v148
      %v212 = vadd.f32 %v211, %v149
      %v213 = vadd.f32 %v212, %v150
      %v214 = vadd.f32 %v213, %v151
      %v215 = vadd.f32 %v214, %v152
      %v216 = vadd.f32 %v215, %v153
      %v217 = vadd.f32 %v216, %v154
      %v218 = vadd.f32 %v217, %v155
      %v219 = vadd.f32 %v218, %v156
      %v220 = vadd.f32 %v219, %v157
      %v221 = vadd.f32 %v220, %v158
      %v222 = vadd.f32 %v221, %v159
      %v223 = vadd.f32 %v222, %v160
      %v224 = vadd.f32 %v223, %v161
      %v225 = vadd.f32 %v224, %v162
      %v226 = vadd.f32 %v225, %v163
      %v227 = vadd.f32 %v226, %v164
      %v228 = vadd.f32 %v227, %v165
      %v229 = vadd.f32 %v228, %v166
      %v230 = vadd.f32 %v229, %v167
      %v231 = vadd.f32 %v230, %v168
      %v232 = vadd.f32 %v231, %v169
      %v233 = vadd.f32 %v232, %v170
      %v234 = vadd.f32 %v233, %v171
      %v235 = vadd.f32 %v234, %v172
      %v236 = vadd.f32 %v235, %v173
      %v237 = vadd.f32 %v236, %v174
      %v238 = vadd.f32 %v237, %v175
      %v239 = vadd.f32 %v238, %v176
      %v240 = vadd.f32 %v239, %v177
      %v241 = vadd.f32 %v240, %v178
      %v242 = vadd.f32 %v241, %v179
      %v243 = vadd.f32 %v242, %v180
      %v244 = vadd.f32 %v243, %v181
      %v245 = vadd.f32 %v244, %v182
      %v246 = vadd.f32 %v245, %v183
      %v247 = vadd.f32 %v246, %v184
      %v248 = vadd.f32 %v247, %v185
      %v249 = vadd.f32 %v248, %v186
      %v250 = vadd.f32 %v249, %v187
      %v251 = vadd.f32 %v250, %v188
      %v252 = vadd.f32 %v251, %v189
      %v253 = vadd.f32 %v252, %v190
      %v254 = vadd.f32 %v253, %v191
      %v255 = vadd.f32 %v254, %v192
      %v256 = vadd.f32 %v255, %v193
      %v257 = vadd.f32 %v256, %v194
      %v258 = vadd.f32 %v257, %v195
      %v259 = vadd.f32 %v258, %v196
      %v260 = vadd.f32 %v259, %v197
      %v261 = vadd.f32 %v260, %v198
      %v262 = vadd.f32 %v261, %v199
      %v263 = vadd.f32 %v262, %v200
      %v264 = vrot.slane %v263, 4
      %v265 = vadd.f32 %v263, %v264
      %v266 = vrot.slane %v265, 2
      %v267 = vadd.f32 %v265, %v266
      %v268 = vrot.slane %v267, 1
      %v269 = vadd.f32 %v267, %v268
      %v270 = vadd.f32 %v136, %v269
      %271 = vst [vmem:[%s2] sm:$0x1] %v270
      %p272 = scmp.eq.s32.totalorder %s13, 1
      // Predicated region
      $region33: #{_forward_impl.1} parent=27 // pred_check
        %p273 = pneg %p272
      $region34: #{_forward_impl.1} parent=27 // pred_check_branch
        %275 = sbr.rel (%p273) target = $region36
      $region35: #{_forward_impl.1} parent=27 // pred_region
        %v276 = vld [vmem:[%s1] sm:$0x1]
        %v277 = vld [vmem:[%s1 + $0x1] sm:$0x1]
        %v278 = vld [vmem:[%s1 + $0x2] sm:$0x1]
        %v279 = vsub.f32 0.0, %v276
        %v280 = vmul.f32 %v279, 1.442695
        %v281 = vpow.pop %v280
        %v282 = vld [vmem:[%s2] sm:$0x1]
        %v283 = vmul.f32 %v281, %v282
        %v284 = vmul.f32 %v277, %v276
        %v285 = vadd.f32 %v283, %v284
        %v286 = vmul.f32 %v278, %v285
        %287 = vst [vmem:[%s2] sm:$0x1] %v286
      $region36: #{_forward_impl.1} parent=27 // pred_fallthru
        _
      // Predicated region
      $region37: #{_forward_impl.1} parent=27 // pred_check
        %p288 = pneg %p73
      $region38: #{_forward_impl.1} parent=27 // pred_check_branch
        %290 = sbr.rel (%p288) target = $region40
      $region39: #{_forward_impl.1} parent=27 // pred_region
        _
      $region40: #{_forward_impl.1} parent=27 // pred_fallthru
        _
      // Predicated region
      $region41: #{_forward_impl.1} parent=27 // pred_check
        %p291 = pneg %p73
      $region42: #{_forward_impl.1} parent=27 // pred_check_branch
        %293 = sbr.rel (%p291) target = $region44
      $region43: #{_forward_impl.1} parent=27 // pred_region
        _
      $region44: #{_forward_impl.1} parent=27 // pred_fallthru
        _
    $region28: #{_forward_impl.1} parent=5 // pred_fallthru
      _
    %p294 = scmp.le.s32.totalorder 2, %s8
    // Predicated region
    $region45: #{_forward_impl.1} parent=5 // pred_check
      %p295 = pneg %p294
    $region46: #{_forward_impl.1} parent=5 // pred_check_branch
      %297 = sbr.rel (%p295) target = $region48
    $region47: #{_forward_impl.1} parent=5 // pred_region
      %s298 = ssub.s32 %s8, 2
    $region48: #{_forward_impl.1} parent=5 // pred_fallthru
      _
  $region6: #{_forward_impl.1} parent=0 // loop_footer
    %s12 = sadd.s32 1, %s8
  $region7: #{_forward_impl.1} parent=0 // loop_footer_branch
    %7 = sbr.rel target = $region3
  $region8: #{_forward_impl.1} parent=0 // loop_exit
    _

</llo_original>
